<compile_context>
chip_gen: v7x
topology: tpu7x:2x2x1
jax: 0.10.0
libtpu: 0.0.40
codegen_flags: <defaults>
</compile_context>

<pallas_src>
import jax
import jax.numpy as jnp
from jax import lax
from jax.experimental import pallas as pl
from jax.experimental.pallas import tpu as pltpu


# Final-layer contraction: (out_f, hidden) x (tm, hidden)^T -> (out_f, tm)  (trans_b / "NT").
_NT_DIM_NUMBERS = (((1,), (1,)), ((), ()))


# ----------------------------------------------------------------------------- kernel
def _mlp_kernel(x_ref, w1_ref, b1_ref, w2_ref, b2_ref, w3t_ref, b3_ref, o_ref):
    """Fused 3-layer MLP on one (block_rows, in_features) tile of the batch."""
    # Layer 1: Linear + ReLU  (bf16 MXU matmul, f32 accumulate / bias / activation).
    h1 = jnp.dot(x_ref[...], w1_ref[...], preferred_element_type=jnp.float32)
    h1 = jnp.maximum(h1 + b1_ref[...], 0.0).astype(w2_ref.dtype)
    # Layer 2: Linear + ReLU
    h2 = jnp.dot(h1, w2_ref[...], preferred_element_type=jnp.float32)
    h2 = jnp.maximum(h2 + b2_ref[...], 0.0).astype(w3t_ref.dtype)
    # Layer 3: Linear (logits), computed directly in the transposed (out_f, tm) layout so
    # the output store / HBM write-back is lane-dense (no masked 1-lane stores).
    out_t = lax.dot_general(w3t_ref[...], h2, _NT_DIM_NUMBERS,
                            preferred_element_type=jnp.float32)
    o_ref[...] = (out_t + b3_ref[...]).astype(o_ref.dtype)


# ----------------------------------------------------------------------------- helpers
def _round_up(x, m):
    return (x + m - 1) // m * m


def _auto_block_rows(in_features, itemsize, *, max_rows=4096, vmem_budget_bytes=16 << 20):
    """Largest 128-multiple batch tile whose VMEM footprint stays well inside budget.

    Accounts for lane padding: the double-buffered x tile plus the f32 intermediates
    (each lane-padded to 128).  Budgeted against v7x (64 MiB physical / 32 MiB default
    scoped VMEM per TC); also safe on v5e/v6e (128 MiB).
    """
    in_lanes = _round_up(max(int(in_features), 1), 128)
    per_row = 2 * in_lanes * itemsize + 4 * 128 * 4   # x (2 bufs) + h1/h2 (+ bf16 copies)
    rows = vmem_budget_bytes // per_row
    rows = max(128, min(max_rows, int(rows)))
    return (rows // 128) * 128


# ----------------------------------------------------------------------------- wrapper
def binary_classification_forward(x, params, *, block_rows=None,
                                  compute_dtype=jnp.bfloat16):
    """x: (B, input_features). params: dict of w1,b1,w2,b2,w3,b3 (f32).

    Returns f32 logits of shape (B, output_features).
    """
    # Cast the bandwidth-dominant operands (x, weights) to the compute dtype; biases stay
    # f32 (accumulation is f32 inside the kernel).
    w1 = params["w1"].astype(compute_dtype)                 # (in_f, hidden)
    w2 = params["w2"].astype(compute_dtype)                 # (hidden, hidden)
    w3_t = params["w3"].astype(compute_dtype).T             # (out_f, hidden)  == PyTorch weight layout
    b1 = params["b1"].astype(jnp.float32).reshape(1, -1)    # (1, hidden)
    b2 = params["b2"].astype(jnp.float32).reshape(1, -1)    # (1, hidden)
    b3 = params["b3"].astype(jnp.float32).reshape(-1, 1)    # (out_f, 1) -> broadcasts over lanes

    B, in_f = x.shape
    hidden = w1.shape[1]
    out_f = w3_t.shape[0]

    itemsize = jnp.dtype(compute_dtype).itemsize
    if block_rows is None:
        block_rows = _auto_block_rows(in_f, itemsize)
    # tm is the lane (last) dim of the transposed output block -> must be a multiple of 128.
    tm = max(128, min(int(block_rows), _round_up(B, 128)))
    tm = _round_up(tm, 128)

    n_tiles = pl.cdiv(B, tm)
    b_pad = n_tiles * tm

    x_c = x.astype(compute_dtype)
    if b_pad != B:
        # Zero-pad the ragged tail; padded rows are computed then sliced off below.
        x_c = jnp.pad(x_c, ((0, b_pad - B), (0, 0)))

    const_idx = lambda i: (0, 0)  # weights/biases: same block every step -> DMA'd once
    out_t = pl.pallas_call(
        _mlp_kernel,
        out_shape=jax.ShapeDtypeStruct((out_f, b_pad), jnp.float32),
        grid=(n_tiles,),
        in_specs=[
            pl.BlockSpec((tm, in_f), lambda i: (i, 0)),    # x: tiled over batch (contiguous reads)
            pl.BlockSpec((in_f, hidden), const_idx),       # w1 (resident)
            pl.BlockSpec((1, hidden), const_idx),          # b1
            pl.BlockSpec((hidden, hidden), const_idx),     # w2
            pl.BlockSpec((1, hidden), const_idx),          # b2
            pl.BlockSpec((out_f, hidden), const_idx),      # w3^T (resident)
            pl.BlockSpec((out_f, 1), const_idx),           # b3
        ],
        # Lane-dense output: last dim is the batch tile -> dense vst + contiguous write-back DMA.
        out_specs=pl.BlockSpec((out_f, tm), lambda i: (0, i)),
        compiler_params=pltpu.CompilerParams(
            dimension_semantics=("parallel",),   # lets v7x shard the batch over 2 TCs
            vmem_limit_bytes=32 * 1024 * 1024,   # explicit; tiles sized well under this
        ),
    )(x_c, w1, b1, w2, b2, w3_t, b3)

    # Tiny (out_f, B) -> (B, out_f) transpose in the wrapper (layout plumbing only).
    return out_t[:, :B].T


# ----------------------------------------------------------------------------- init / ref
def init_params(key, input_features, hidden_units=10, output_features=1):
    """Mimics PyTorch nn.Linear default init: U[-1/sqrt(fan_in), 1/sqrt(fan_in)]."""
    def linear_init(k, fan_in, fan_out):
        kw, kb = jax.random.split(k)
        bound = 1.0 / jnp.sqrt(jnp.float32(fan_in))
        w = jax.random.uniform(kw, (fan_in, fan_out), jnp.float32, -bound, bound)
        b = jax.random.uniform(kb, (1, fan_out), jnp.float32, -bound, bound)
        return w, b

    k1, k2, k3 = jax.random.split(key, 3)
    w1, b1 = linear_init(k1, input_features, hidden_units)
    w2, b2 = linear_init(k2, hidden_units, hidden_units)
    w3, b3 = linear_init(k3, hidden_units, output_features)
    return {"w1": w1, "b1": b1, "w2": w2, "b2": b2, "w3": w3, "b3": b3}


def reference_forward(x, params):
    h1 = jnp.maximum(x @ params["w1"] + params["b1"], 0.0)
    h2 = jnp.maximum(h1 @ params["w2"] + params["b2"], 0.0)
    return h2 @ params["w3"] + params["b3"]


# ----------------------------------------------------------------------------- demo
if __name__ == "__main__":
    key = jax.random.PRNGKey(0)
    k_x, k_p = jax.random.split(key)

    batch = 300            # ragged on purpose: exercises padding + a multi-step grid
    input_features = 32
    hidden_units = 10
    output_features = 1

    x = jax.random.normal(k_x, (batch, input_features), jnp.float32)
    params = init_params(k_p, input_features, hidden_units, output_features)
    ref = reference_forward(x, params)

    # Default bf16 compute path with a small batch tile (3-step grid, pipeline exercised).
    out_bf16 = binary_classification_forward(x, params, block_rows=128)
    out_bf16 = jax.block_until_ready(out_bf16)
    assert out_bf16.shape == (batch, output_features)
    # bf16 inputs -> loosened tolerance vs the f32 reference.
    assert jnp.allclose(out_bf16, ref, atol=5e-2, rtol=5e-2)

    # f32 compute path for a tight numerical check of the kernel structure.
    out_f32 = binary_classification_forward(
        x, params, block_rows=128, compute_dtype=jnp.float32)
    out_f32 = jax.block_until_ready(out_f32)
    assert out_f32.shape == (batch, output_features)
    assert jnp.allclose(out_f32, ref, atol=1e-4, rtol=1e-4)

    # Auto-sized tile path (single grid step for this batch).
    out_auto = binary_classification_forward(x, params)
    out_auto = jax.block_until_ready(out_auto)
    assert out_auto.shape == (batch, output_features)
    assert jnp.allclose(out_auto, ref, atol=5e-2, rtol=5e-2)

    print("KERNEL_OK")
</pallas_src>

<mosaic_0001>
module attributes {stable_mosaic.version = 11 : i64} {
  func.func @_mlp_kernel(%arg0: i32, %arg1: memref<128x32xbf16, #tpu.memory_space<vmem>>, %arg2: memref<32x10xbf16, #tpu.memory_space<vmem>>, %arg3: memref<1x10xf32, #tpu.memory_space<vmem>>, %arg4: memref<10x10xbf16, #tpu.memory_space<vmem>>, %arg5: memref<1x10xf32, #tpu.memory_space<vmem>>, %arg6: memref<1x10xbf16, #tpu.memory_space<vmem>>, %arg7: memref<1x1xf32, #tpu.memory_space<vmem>>, %arg8: memref<1x128xf32, #tpu.memory_space<vmem>>) attributes {dimension_semantics = [#tpu.dimension_semantics<parallel>], iteration_bounds = array<i64: 3>, scalar_prefetch = 0 : i64, scratch_operands = 0 : i64, tpu.core_type = #tpu.core_type<tc>, window_params = [{transform_indices = @transform_0, window_bounds = array<i64: 128, 32>}, {pipeline_mode = #tpu.pipeline_mode<synchronous>, transform_indices = @transform_1, window_bounds = array<i64: 32, 10>}, {pipeline_mode = #tpu.pipeline_mode<synchronous>, transform_indices = @transform_2, window_bounds = array<i64: 1, 10>}, {pipeline_mode = #tpu.pipeline_mode<synchronous>, transform_indices = @transform_3, window_bounds = array<i64: 10, 10>}, {pipeline_mode = #tpu.pipeline_mode<synchronous>, transform_indices = @transform_4, window_bounds = array<i64: 1, 10>}, {pipeline_mode = #tpu.pipeline_mode<synchronous>, transform_indices = @transform_5, window_bounds = array<i64: 1, 10>}, {pipeline_mode = #tpu.pipeline_mode<synchronous>, transform_indices = @transform_6, window_bounds = array<i64: 1, 1>}, {transform_indices = @transform_7, window_bounds = array<i64: 1, 128>}]} {
    %c0 = arith.constant 0 : index
    %c0_0 = arith.constant 0 : index
    %0 = vector.load %arg1[%c0, %c0_0] : memref<128x32xbf16, #tpu.memory_space<vmem>>, vector<128x32xbf16>
    %c0_1 = arith.constant 0 : index
    %c0_2 = arith.constant 0 : index
    %1 = vector.load %arg2[%c0_1, %c0_2] : memref<32x10xbf16, #tpu.memory_space<vmem>>, vector<32x10xbf16>
    %cst = arith.constant dense<0.000000e+00> : vector<128x10xf32>
    %2 = tpu.matmul %0, %1, %cst {dimension_numbers = #tpu.dot_dimension_numbers<[1], [0], [0], [1], [0, 0, 1, 1], [], []>} : vector<128x32xbf16>, vector<32x10xbf16>, vector<128x10xf32> -> vector<128x10xf32>
    %c0_3 = arith.constant 0 : index
    %c0_4 = arith.constant 0 : index
    %3 = vector.load %arg3[%c0_3, %c0_4] : memref<1x10xf32, #tpu.memory_space<vmem>>, vector<1x10xf32>
    %4 = vector.broadcast %3 : vector<1x10xf32> to vector<128x10xf32>
    %5 = arith.addf %2, %4 : vector<128x10xf32>
    %cst_5 = arith.constant 0.000000e+00 : f32
    %6 = vector.broadcast %cst_5 : f32 to vector<128x10xf32>
    %7 = arith.maximumf %5, %6 : vector<128x10xf32>
    %8 = arith.truncf %7 : vector<128x10xf32> to vector<128x10xbf16>
    %c0_6 = arith.constant 0 : index
    %c0_7 = arith.constant 0 : index
    %9 = vector.load %arg4[%c0_6, %c0_7] : memref<10x10xbf16, #tpu.memory_space<vmem>>, vector<10x10xbf16>
    %cst_8 = arith.constant dense<0.000000e+00> : vector<128x10xf32>
    %10 = tpu.matmul %8, %9, %cst_8 {dimension_numbers = #tpu.dot_dimension_numbers<[1], [0], [0], [1], [0, 0, 1, 1], [], []>} : vector<128x10xbf16>, vector<10x10xbf16>, vector<128x10xf32> -> vector<128x10xf32>
    %c0_9 = arith.constant 0 : index
    %c0_10 = arith.constant 0 : index
    %11 = vector.load %arg5[%c0_9, %c0_10] : memref<1x10xf32, #tpu.memory_space<vmem>>, vector<1x10xf32>
    %12 = vector.broadcast %11 : vector<1x10xf32> to vector<128x10xf32>
    %13 = arith.addf %10, %12 : vector<128x10xf32>
    %cst_11 = arith.constant 0.000000e+00 : f32
    %14 = vector.broadcast %cst_11 : f32 to vector<128x10xf32>
    %15 = arith.maximumf %13, %14 : vector<128x10xf32>
    %16 = arith.truncf %15 : vector<128x10xf32> to vector<128x10xbf16>
    %c0_12 = arith.constant 0 : index
    %c0_13 = arith.constant 0 : index
    %17 = vector.load %arg6[%c0_12, %c0_13] : memref<1x10xbf16, #tpu.memory_space<vmem>>, vector<1x10xbf16>
    %cst_14 = arith.constant dense<0.000000e+00> : vector<1x128xf32>
    %18 = tpu.matmul %17, %16, %cst_14 {dimension_numbers = #tpu.dot_dimension_numbers<[1], [1], [0], [0], [0, 0, 1, 0], [], []>} : vector<1x10xbf16>, vector<128x10xbf16>, vector<1x128xf32> -> vector<1x128xf32>
    %c0_15 = arith.constant 0 : index
    %c0_16 = arith.constant 0 : index
    %19 = vector.load %arg7[%c0_15, %c0_16] : memref<1x1xf32, #tpu.memory_space<vmem>>, vector<1x1xf32>
    %20 = vector.broadcast %19 : vector<1x1xf32> to vector<1x128xf32>
    %21 = arith.addf %18, %20 : vector<1x128xf32>
    %c0_17 = arith.constant 0 : index
    %c0_18 = arith.constant 0 : index
    %22 = vector.load %arg8[%c0_17, %c0_18] : memref<1x128xf32, #tpu.memory_space<vmem>>, vector<1x128xf32>
    tpu.vector_store %arg8[%c0_17, %c0_18], %21 {strides = array<i32>} : memref<1x128xf32, #tpu.memory_space<vmem>>, vector<1x128xf32>,
    return
  }
  func.func @transform_0(%arg0: i32) -> (i32, i32) {
    %c0_i32 = arith.constant 0 : i32
    %c0_i32_0 = arith.constant 0 : i32
    return %arg0, %c0_i32 : i32, i32
  }
  func.func @transform_1(%arg0: i32) -> (i32, i32) {
    %c0_i32 = arith.constant 0 : i32
    %c0_i32_0 = arith.constant 0 : i32
    %c0_i32_1 = arith.constant 0 : i32
    return %c0_i32, %c0_i32_0 : i32, i32
  }
  func.func @transform_2(%arg0: i32) -> (i32, i32) {
    %c0_i32 = arith.constant 0 : i32
    %c0_i32_0 = arith.constant 0 : i32
    %c0_i32_1 = arith.constant 0 : i32
    return %c0_i32, %c0_i32_0 : i32, i32
  }
  func.func @transform_3(%arg0: i32) -> (i32, i32) {
    %c0_i32 = arith.constant 0 : i32
    %c0_i32_0 = arith.constant 0 : i32
    %c0_i32_1 = arith.constant 0 : i32
    return %c0_i32, %c0_i32_0 : i32, i32
  }
  func.func @transform_4(%arg0: i32) -> (i32, i32) {
    %c0_i32 = arith.constant 0 : i32
    %c0_i32_0 = arith.constant 0 : i32
    %c0_i32_1 = arith.constant 0 : i32
    return %c0_i32, %c0_i32_0 : i32, i32
  }
  func.func @transform_5(%arg0: i32) -> (i32, i32) {
    %c0_i32 = arith.constant 0 : i32
    %c0_i32_0 = arith.constant 0 : i32
    %c0_i32_1 = arith.constant 0 : i32
    return %c0_i32, %c0_i32_0 : i32, i32
  }
  func.func @transform_6(%arg0: i32) -> (i32, i32) {
    %c0_i32 = arith.constant 0 : i32
    %c0_i32_0 = arith.constant 0 : i32
    %c0_i32_1 = arith.constant 0 : i32
    return %c0_i32, %c0_i32_0 : i32, i32
  }
  func.func @transform_7(%arg0: i32) -> (i32, i32) {
    %c0_i32 = arith.constant 0 : i32
    %c0_i32_0 = arith.constant 0 : i32
    return %c0_i32, %arg0 : i32, i32
  }
}

</mosaic_0001>

<llo_original>
// kernel: tpu_custom_call.1
$region0: #{tpu_custom_call.1}
  #allocation0 [shape = 'u32[]', space=smem, size = 0x4, offset = 0x4, fixed_abs, tag = 'smem constant byte address 0x4 - core index']
  #allocation1 [shape = 'u32[144,128]{1,0:T(1,128)}', space=vmem, size = 0x12000, scoped, tag = 'internal scratch']
  #allocation2 [shape = 'f32[1,1]{1,0:T(1,128)S(1)}', space=vmem, size = 0x200, scoped, tag = 'scoped memory for tpu_custom_call.1']
  %s0 = inlined_call_operand.vmem [shape: bf16[384,32], index: 0, kind: input, shape index: {}]
  %s1 = inlined_call_operand.vmem [shape: bf16[32,10], index: 1, kind: input, shape index: {}]
  %s2 = inlined_call_operand.vmem [shape: f32[1,10], index: 2, kind: input, shape index: {}]
  %s3 = inlined_call_operand.vmem [shape: bf16[10,10], index: 3, kind: input, shape index: {}]
  %s4 = inlined_call_operand.vmem [shape: f32[1,10], index: 4, kind: input, shape index: {}]
  %s5 = inlined_call_operand.vmem [shape: bf16[1,10], index: 5, kind: input, shape index: {}]
  %s6 = inlined_call_operand.<no memory space> [shape: f32[1,1], index: 6, kind: input, shape index: {}]
  %s7 = inlined_call_operand.hbm [shape: f32[1,384], index: 7, kind: output, shape index: {}]
  %s8 = sld [smem:[#allocation0]]
  $region61: #{tpu_custom_call.1} parent=0
    _
  %s10 = ssub.s32 1, %s8
  %s11 = scalar_select 0, %s10, %s8
  %v12 = vstv %s6
  %13 = vst [vmem:[#allocation2] sm:$0x1] %v12
  $region1: #{tpu_custom_call.1} parent=0
    #allocation3 [shape = 'u8[1024]{0}', space=vmem, size = 0x400, scoped, tag = 'output window, operand 0']
    #allocation4 [shape = 's32[2]{0}', space=sflag, size = 0x8, scoped, tag = 'scoped memory for tpu_custom_call.1']
    %14 = vsyncpa [#allocation4], 0
    %s15 = scalar_lea.sflag [#allocation4], 1
    %16 = vsyncpa %s15, 0
    loop: start=0, step=1, limit=5
    $region2: #{tpu_custom_call.1} parent=1 // loop_pre_header
      _
    $region3: #{tpu_custom_call.1} parent=1 // loop_header
      %s18 = sphi 0, %s22
      %p19 = scmp.ge.s32.totalorder %s18, 5
      %s28 = sphi 0, %s30
      %s31 = sphi 0, %s28
      %s32 = sphi 0, %s31
      %s48 = sphi 0, %s32
      %s52 = sphi 0, %s52
      %s54 = sphi 0, %s52
      %s55 = sphi 0, %s54
      %s69 = sphi 0, %s55
      %s73 = sphi 0, %s73
      %s75 = sphi 0, %s73
      %s76 = sphi 0, %s75
      %s90 = sphi 0, %s76
      %s94 = sphi 0, %s94
      %s96 = sphi 0, %s94
      %s97 = sphi 0, %s96
      %s111 = sphi 0, %s97
      %s115 = sphi 0, %s115
      %s117 = sphi 0, %s115
      %s118 = sphi 0, %s117
      %s132 = sphi 0, %s118
      %s136 = sphi 0, %s136
      %s138 = sphi 0, %s136
      %s139 = sphi 0, %s138
      %s153 = sphi 0, %s139
      %s157 = sphi 0, %s157
      %s159 = sphi 0, %s157
      %s160 = sphi 0, %s159
      %s174 = sphi 0, %s160
      %s180 = sphi 0, %s182
      %s183 = sphi 0, %s180
      %s184 = sphi 0, %s183
      %s200 = sphi 0, %s184
    $region4: #{tpu_custom_call.1} parent=1 // loop_header_branch
      %21 = sbr.rel (%p19) target = $region8
    $region5: #{tpu_custom_call.1} parent=1 // loop_body
      %s23 = ssub.s32 %s18, 1
      %s24 = ssub.s32 %s18, 2
      %s25 = sadd.s32 %s18, 1
      %s26 = ssub.s32 %s18, %s25
      %p27 = scmp.eq.s32.totalorder %s26, 0
      %s29 = sadd.s32 %s28, 1
      %s30 = scalar_select %p27, %s28, %s29
      %p33 = pneg %p27
      %p34 = scmp.eq.s32.totalorder %s18, 2
      %p35 = por %p33, %p34
      %p36 = scmp.ne.s32.totalorder %s28, %s31
      %p37 = scmp.eq.s32.totalorder %s18, 0
      %p38 = por %p36, %p37
      %p39 = scmp.ne.s32.totalorder %s28, %s31
      %p40 = scmp.eq.s32.totalorder %s23, 2
      %p41 = por %p39, %p40
      %p42 = scmp.ne.s32.totalorder %s31, %s32
      %p43 = scmp.eq.s32.totalorder %s23, 0
      %p44 = por %p42, %p43
      %p45 = scmp.ne.s32.totalorder %s31, %s32
      %p46 = scmp.eq.s32.totalorder %s24, 2
      %p47 = por %p45, %p46
      %p49 = scmp.ne.s32.totalorder %s32, %s48
      %p50 = scmp.eq.s32.totalorder %s24, 0
      %p51 = por %p49, %p50
      %s53 = sadd.s32 %s52, 1
      %p56 = scmp.eq.s32.totalorder %s18, 2
      %p57 = scmp.ne.s32.totalorder %s52, %s54
      %p58 = scmp.eq.s32.totalorder %s18, 0
      %p59 = por %p57, %p58
      %p60 = scmp.ne.s32.totalorder %s52, %s54
      %p61 = scmp.eq.s32.totalorder %s23, 2
      %p62 = por %p60, %p61
      %p63 = scmp.ne.s32.totalorder %s54, %s55
      %p64 = scmp.eq.s32.totalorder %s23, 0
      %p65 = por %p63, %p64
      %p66 = scmp.ne.s32.totalorder %s54, %s55
      %p67 = scmp.eq.s32.totalorder %s24, 2
      %p68 = por %p66, %p67
      %p70 = scmp.ne.s32.totalorder %s55, %s69
      %p71 = scmp.eq.s32.totalorder %s24, 0
      %p72 = por %p70, %p71
      %s74 = sadd.s32 %s73, 1
      %p77 = scmp.eq.s32.totalorder %s18, 2
      %p78 = scmp.ne.s32.totalorder %s73, %s75
      %p79 = scmp.eq.s32.totalorder %s18, 0
      %p80 = por %p78, %p79
      %p81 = scmp.ne.s32.totalorder %s73, %s75
      %p82 = scmp.eq.s32.totalorder %s23, 2
      %p83 = por %p81, %p82
      %p84 = scmp.ne.s32.totalorder %s75, %s76
      %p85 = scmp.eq.s32.totalorder %s23, 0
      %p86 = por %p84, %p85
      %p87 = scmp.ne.s32.totalorder %s75, %s76
      %p88 = scmp.eq.s32.totalorder %s24, 2
      %p89 = por %p87, %p88
      %p91 = scmp.ne.s32.totalorder %s76, %s90
      %p92 = scmp.eq.s32.totalorder %s24, 0
      %p93 = por %p91, %p92
      %s95 = sadd.s32 %s94, 1
      %p98 = scmp.eq.s32.totalorder %s18, 2
      %p99 = scmp.ne.s32.totalorder %s94, %s96
      %p100 = scmp.eq.s32.totalorder %s18, 0
      %p101 = por %p99, %p100
      %p102 = scmp.ne.s32.totalorder %s94, %s96
      %p103 = scmp.eq.s32.totalorder %s23, 2
      %p104 = por %p102, %p103
      %p105 = scmp.ne.s32.totalorder %s96, %s97
      %p106 = scmp.eq.s32.totalorder %s23, 0
      %p107 = por %p105, %p106
      %p108 = scmp.ne.s32.totalorder %s96, %s97
      %p109 = scmp.eq.s32.totalorder %s24, 2
      %p110 = por %p108, %p109
      %p112 = scmp.ne.s32.totalorder %s97, %s111
      %p113 = scmp.eq.s32.totalorder %s24, 0
      %p114 = por %p112, %p113
      %s116 = sadd.s32 %s115, 1
      %p119 = scmp.eq.s32.totalorder %s18, 2
      %p120 = scmp.ne.s32.totalorder %s115, %s117
      %p121 = scmp.eq.s32.totalorder %s18, 0
      %p122 = por %p120, %p121
      %p123 = scmp.ne.s32.totalorder %s115, %s117
      %p124 = scmp.eq.s32.totalorder %s23, 2
      %p125 = por %p123, %p124
      %p126 = scmp.ne.s32.totalorder %s117, %s118
      %p127 = scmp.eq.s32.totalorder %s23, 0
      %p128 = por %p126, %p127
      %p129 = scmp.ne.s32.totalorder %s117, %s118
      %p130 = scmp.eq.s32.totalorder %s24, 2
      %p131 = por %p129, %p130
      %p133 = scmp.ne.s32.totalorder %s118, %s132
      %p134 = scmp.eq.s32.totalorder %s24, 0
      %p135 = por %p133, %p134
      %s137 = sadd.s32 %s136, 1
      %p140 = scmp.eq.s32.totalorder %s18, 2
      %p141 = scmp.ne.s32.totalorder %s136, %s138
      %p142 = scmp.eq.s32.totalorder %s18, 0
      %p143 = por %p141, %p142
      %p144 = scmp.ne.s32.totalorder %s136, %s138
      %p145 = scmp.eq.s32.totalorder %s23, 2
      %p146 = por %p144, %p145
      %p147 = scmp.ne.s32.totalorder %s138, %s139
      %p148 = scmp.eq.s32.totalorder %s23, 0
      %p149 = por %p147, %p148
      %p150 = scmp.ne.s32.totalorder %s138, %s139
      %p151 = scmp.eq.s32.totalorder %s24, 2
      %p152 = por %p150, %p151
      %p154 = scmp.ne.s32.totalorder %s139, %s153
      %p155 = scmp.eq.s32.totalorder %s24, 0
      %p156 = por %p154, %p155
      %s158 = sadd.s32 %s157, 1
      %p161 = scmp.eq.s32.totalorder %s18, 2
      %p162 = scmp.ne.s32.totalorder %s157, %s159
      %p163 = scmp.eq.s32.totalorder %s18, 0
      %p164 = por %p162, %p163
      %p165 = scmp.ne.s32.totalorder %s157, %s159
      %p166 = scmp.eq.s32.totalorder %s23, 2
      %p167 = por %p165, %p166
      %p168 = scmp.ne.s32.totalorder %s159, %s160
      %p169 = scmp.eq.s32.totalorder %s23, 0
      %p170 = por %p168, %p169
      %p171 = scmp.ne.s32.totalorder %s159, %s160
      %p172 = scmp.eq.s32.totalorder %s24, 2
      %p173 = por %p171, %p172
      %p175 = scmp.ne.s32.totalorder %s160, %s174
      %p176 = scmp.eq.s32.totalorder %s24, 0
      %p177 = por %p175, %p176
      %s178 = ssub.s32 %s18, %s25
      %p179 = scmp.eq.s32.totalorder %s178, 0
      %s181 = sadd.s32 %s180, 1
      %s182 = scalar_select %p179, %s180, %s181
      %p185 = pneg %p179
      %p186 = scmp.eq.s32.totalorder %s18, 2
      %p187 = por %p185, %p186
      %p188 = scmp.ne.s32.totalorder %s180, %s183
      %p189 = scmp.eq.s32.totalorder %s18, 0
      %p190 = por %p188, %p189
      %p191 = scmp.ne.s32.totalorder %s180, %s183
      %p192 = scmp.eq.s32.totalorder %s23, 2
      %p193 = por %p191, %p192
      %p194 = scmp.ne.s32.totalorder %s183, %s184
      %p195 = scmp.eq.s32.totalorder %s23, 0
      %p196 = por %p194, %p195
      %p197 = scmp.ne.s32.totalorder %s183, %s184
      %p198 = scmp.eq.s32.totalorder %s24, 2
      %p199 = por %p197, %p198
      %p201 = scmp.ne.s32.totalorder %s184, %s200
      %p202 = scmp.eq.s32.totalorder %s24, 0
      %p203 = por %p201, %p202
      %p204 = scmp.le.s32.totalorder 1, %s18
      %p205 = scmp.lt.s32.totalorder %s18, 4
      %p206 = pnand %p204, %p205
      %p207 = pneg %p206
      // Predicated region
      $region9: #{tpu_custom_call.1} parent=5 // pred_check
        _
      $region10: #{tpu_custom_call.1} parent=5 // pred_check_branch
        %209 = sbr.rel (%p206) target = $region12
      $region11: #{tpu_custom_call.1} parent=5 // pred_region
        %s210 = ssub.s32 %s18, 1
        // Predicated region
        $region13: #{tpu_custom_call.1} parent=11 // pred_check
          %p211 = pneg %p65
        $region14: #{tpu_custom_call.1} parent=11 // pred_check_branch
          %213 = sbr.rel (%p211) target = $region16
        $region15: #{tpu_custom_call.1} parent=11 // pred_region
          _
        $region16: #{tpu_custom_call.1} parent=11 // pred_fallthru
          _
        // Predicated region
        $region17: #{tpu_custom_call.1} parent=11 // pred_check
          %p214 = pneg %p86
        $region18: #{tpu_custom_call.1} parent=11 // pred_check_branch
          %216 = sbr.rel (%p214) target = $region20
        $region19: #{tpu_custom_call.1} parent=11 // pred_region
          _
        $region20: #{tpu_custom_call.1} parent=11 // pred_fallthru
          _
        // Predicated region
        $region21: #{tpu_custom_call.1} parent=11 // pred_check
          %p217 = pneg %p107
        $region22: #{tpu_custom_call.1} parent=11 // pred_check_branch
          %219 = sbr.rel (%p217) target = $region24
        $region23: #{tpu_custom_call.1} parent=11 // pred_region
          _
        $region24: #{tpu_custom_call.1} parent=11 // pred_fallthru
          _
        // Predicated region
        $region25: #{tpu_custom_call.1} parent=11 // pred_check
          %p220 = pneg %p128
        $region26: #{tpu_custom_call.1} parent=11 // pred_check_branch
          %222 = sbr.rel (%p220) target = $region28
        $region27: #{tpu_custom_call.1} parent=11 // pred_region
          _
        $region28: #{tpu_custom_call.1} parent=11 // pred_fallthru
          _
        // Predicated region
        $region29: #{tpu_custom_call.1} parent=11 // pred_check
          %p223 = pneg %p149
        $region30: #{tpu_custom_call.1} parent=11 // pred_check_branch
          %225 = sbr.rel (%p223) target = $region32
        $region31: #{tpu_custom_call.1} parent=11 // pred_region
          _
        $region32: #{tpu_custom_call.1} parent=11 // pred_fallthru
          _
        // Predicated region
        $region33: #{tpu_custom_call.1} parent=11 // pred_check
          %p226 = pneg %p170
        $region34: #{tpu_custom_call.1} parent=11 // pred_check_branch
          %228 = sbr.rel (%p226) target = $region36
        $region35: #{tpu_custom_call.1} parent=11 // pred_region
          _
        $region36: #{tpu_custom_call.1} parent=11 // pred_fallthru
          _
      $region12: #{tpu_custom_call.1} parent=5 // pred_fallthru
        _
      %p229 = scmp.lt.s32.totalorder %s18, 3
      // Predicated region
      $region37: #{tpu_custom_call.1} parent=5 // pred_check
        %p230 = pneg %p229
      $region38: #{tpu_custom_call.1} parent=5 // pred_check_branch
        %232 = sbr.rel (%p230) target = $region40
      $region39: #{tpu_custom_call.1} parent=5 // pred_region
        // Predicated region
        $region41: #{tpu_custom_call.1} parent=39 // pred_check
          %p233 = pneg %p38
        $region42: #{tpu_custom_call.1} parent=39 // pred_check_branch
          %235 = sbr.rel (%p233) target = $region44
        $region43: #{tpu_custom_call.1} parent=39 // pred_region
          %s236 = smul.u32 16, %s18
          %p237 = scmp.lt.s32.totalorder %s236, 47
          %s238 = scalar_select %p237, %s236, 47
          %s239 = smul.addr %s238, 4
          %s240 = scalar_lea.vmem %s0, %s239
          %s241 = smul.u32 16, %s18
        $region44: #{tpu_custom_call.1} parent=39 // pred_fallthru
          _
      $region40: #{tpu_custom_call.1} parent=5 // pred_fallthru
        _
      %p242 = scmp.le.s32.totalorder 1, %s18
      %p243 = scmp.lt.s32.totalorder %s18, 4
      %p244 = pnand %p242, %p243
      %p245 = pneg %p244
      // Predicated region
      $region45: #{tpu_custom_call.1} parent=5 // pred_check
        _
      $region46: #{tpu_custom_call.1} parent=5 // pred_check_branch
        %247 = sbr.rel (%p244) target = $region48
      $region47: #{tpu_custom_call.1} parent=5 // pred_region
        %s248 = ssub.s32 %s18, 1
        %s249 = smul.u32 16, %s23
        %p250 = scmp.lt.s32.totalorder %s249, 47
        %s251 = scalar_select %p250, %s249, 47
        %s252 = smul.addr %s251, 4
        %s253 = scalar_lea.vmem %s0, %s252
        %p254 = pneg %p44
        %p255 = pneg %p41
        %p256 = pneg %p65
        %p257 = pneg %p62
        %p258 = pneg %p86
        %p259 = pneg %p83
        %p260 = pneg %p107
        %p261 = pneg %p104
        %p262 = pneg %p128
        %p263 = pneg %p125
        %p264 = pneg %p149
        %p265 = pneg %p146
        %p266 = pneg %p170
        %p267 = pneg %p167
        %p268 = pneg %p196
        %p269 = pneg %p193
        %s270 = sand.u32 %s183, 1
        %s271 = scalar_lea.sflag [#allocation4], %s270
        %s272 = sand.u32 %s183, 1
        %s273 = scalar_lea.vmem [#allocation3], %s272
        %s274 = smul.u32 16, %s23
        %p275 = scmp.lt.s32.totalorder %s274, 47
        %s276 = scalar_select %p275, %s274, 47
        %s277 = smul.addr %s276, 4
        %s278 = scalar_lea.vmem %s0, %s277
        %s279 = smul.u32 16, %s23
        %v281 = vld [vmem:[%s278] sm:$0xf]
        %v282 = vld [vmem:[%s278 + $0x4] sm:$0xf]
        %v283 = vld [vmem:[%s278 + $0x8] sm:$0xf]
        %v284 = vld [vmem:[%s278 + $0xc] sm:$0xf]
        %v285 = vld [vmem:[%s278 + $0x10] sm:$0xf]
        %v286 = vld [vmem:[%s278 + $0x14] sm:$0xf]
        %v287 = vld [vmem:[%s278 + $0x18] sm:$0xf]
        %v288 = vld [vmem:[%s278 + $0x1c] sm:$0xf]
        %v289 = vld [vmem:[%s278 + $0x20] sm:$0xf]
        %v290 = vld [vmem:[%s278 + $0x24] sm:$0xf]
        %v291 = vld [vmem:[%s278 + $0x28] sm:$0xf]
        %v292 = vld [vmem:[%s278 + $0x2c] sm:$0xf]
        %v293 = vld [vmem:[%s278 + $0x30] sm:$0xf]
        %v294 = vld [vmem:[%s278 + $0x34] sm:$0xf]
        %v295 = vld [vmem:[%s278 + $0x38] sm:$0xf]
        %v296 = vld [vmem:[%s278 + $0x3c] sm:$0xf]
        %v297 = vld [vmem:[%s1] sm:$0xf]
        %v298 = vld [vmem:[%s1 + $0x4] sm:$0xf]
        %v299 = vld [vmem:[%s1 + $0x8] sm:$0xf]
        %v300 = vld [vmem:[%s1 + $0xc] sm:$0xf]
        %v301 = vld [vmem:[%s2] sm:$0x1]
        %v303 = vlaneseq
        %v304 = vshrl.u32 %v303, 7
        %v305 = vsub.s32 0, %v304
        %v306 = vrot.slane %v301, %v305
        %v324 = vunpack.c.l.b16 %v281
        %v325 = vunpack.c.l.b16 %v282
        %v326 = vunpack.c.l.b16 %v283
        %v327 = vunpack.c.l.b16 %v284
        %v328 = vunpack.c.l.b16 %v285
        %v329 = vunpack.c.l.b16 %v286
        %v330 = vunpack.c.l.b16 %v287
        %v331 = vunpack.c.l.b16 %v288
        %v332 = vunpack.c.l.b16 %v289
        %v333 = vunpack.c.l.b16 %v290
        %v334 = vunpack.c.l.b16 %v291
        %v335 = vunpack.c.l.b16 %v292
        %v336 = vunpack.c.l.b16 %v293
        %v337 = vunpack.c.l.b16 %v294
        %v338 = vunpack.c.l.b16 %v295
        %v339 = vunpack.c.l.b16 %v296
        %v340 = vpack.c.b16 %v325, %v324
        %v341 = vpack.c.b16 %v327, %v326
        %v342 = vpack.c.b16 %v329, %v328
        %v343 = vpack.c.b16 %v331, %v330
        %v344 = vpack.c.b16 %v333, %v332
        %v345 = vpack.c.b16 %v335, %v334
        %v346 = vpack.c.b16 %v337, %v336
        %v347 = vpack.c.b16 %v339, %v338
        %v352 = vunpack.c.l.b16 %v297
        %v353 = vunpack.c.l.b16 %v298
        %v354 = vunpack.c.l.b16 %v299
        %v355 = vunpack.c.l.b16 %v300
        %v356 = vpack.c.b16 %v353, %v352
        %v357 = vpack.c.b16 %v355, %v354
        %vm360 = vcmask 261120
        %v362 = vsel %vm360, %v340, 0
        %v365 = vsel %vm360, %v341, 0
        %v368 = vsel %vm360, %v342, 0
        %v371 = vsel %vm360, %v343, 0
        %v374 = vsel %vm360, %v344, 0
        %v377 = vsel %vm360, %v345, 0
        %v380 = vsel %vm360, %v346, 0
        %v383 = vsel %vm360, %v347, 0
        %385 = vmatprep.subr.bf16.mxu0 0
        %386 = vmatpush1.bf16.msra.mxu0 %v356
        %387 = vmatprep.subr.bf16.mxu0 0
        %388 = vmatpush1.bf16.msra.mxu0 %v357
        %389 = vmatprep.subr.bf16.mxu0 0
        %390 = vmatpush1.bf16.msra.mxu0 0
        %391 = vmatprep.subr.bf16.mxu0 0
        %392 = vmatpush1.bf16.msra.mxu0 0
        %393 = vmatprep.subr.bf16.mxu0 0
        %394 = vmatpush1.bf16.msra.mxu0 0
        %395 = vmatprep.subr.bf16.mxu0 0
        %396 = vmatpush1.bf16.msra.mxu0 0
        %397 = vmatprep.subr.bf16.mxu0 0
        %398 = vmatpush1.bf16.msra.mxu0 0
        %399 = vmatprep.subr.bf16.mxu0 0
        %400 = vmatpush1.bf16.msra.mxu0 0
        %401 = vmatprep.subr.bf16.mxu0 0
        %402 = vmatpush1.bf16.msra.mxu0 0
        %403 = vmatprep.subr.bf16.mxu0 0
        %404 = vmatpush1.bf16.msra.mxu0 0
        %405 = vmatprep.subr.bf16.mxu0 0
        %406 = vmatpush1.bf16.msra.mxu0 0
        %407 = vmatprep.subr.bf16.mxu0 0
        %408 = vmatpush1.bf16.msra.mxu0 0
        %409 = vmatprep.subr.bf16.mxu0 0
        %410 = vmatpush1.bf16.msra.mxu0 0
        %411 = vmatprep.subr.bf16.mxu0 0
        %412 = vmatpush1.bf16.msra.mxu0 0
        %413 = vmatprep.subr.bf16.mxu0 0
        %414 = vmatpush1.bf16.msra.mxu0 0
        %415 = vmatprep.subr.bf16.mxu0 0
        %416 = vmatpush1.bf16.msra.mxu0 0
        %417 = vmatprep.mubr.bf16.mxu0 0
        %418 = vmatmul.mubr.bf16.gmra.mrb[0].mxu0 %v362
        %v419 = vpop.f32.mrb[0].mxu0
        %v420 = vadd.f32 %v306, %v419
        %v421 = vpop.f32.mrb[0].mxu0
        %v422 = vpop.f32.mrb[0].mxu0
        %v423 = vadd.f32 %v306, %v422
        %v424 = vpop.f32.mrb[0].mxu0
        %425 = vmatprep.mubr.bf16.mxu0 0
        %426 = vmatmul.mubr.bf16.gmra.mrb[0].mxu0 %v365
        %v427 = vpop.f32.mrb[0].mxu0
        %v428 = vadd.f32 %v306, %v427
        %v429 = vpop.f32.mrb[0].mxu0
        %v430 = vpop.f32.mrb[0].mxu0
        %v431 = vadd.f32 %v306, %v430
        %v432 = vpop.f32.mrb[0].mxu0
        %433 = vmatprep.mubr.bf16.mxu0 0
        %434 = vmatmul.mubr.bf16.gmra.mrb[0].mxu0 %v368
        %v435 = vpop.f32.mrb[0].mxu0
        %v436 = vadd.f32 %v306, %v435
        %v437 = vpop.f32.mrb[0].mxu0
        %v438 = vpop.f32.mrb[0].mxu0
        %v439 = vadd.f32 %v306, %v438
        %v440 = vpop.f32.mrb[0].mxu0
        %441 = vmatprep.mubr.bf16.mxu0 0
        %442 = vmatmul.mubr.bf16.gmra.mrb[0].mxu0 %v371
        %v443 = vpop.f32.mrb[0].mxu0
        %v444 = vadd.f32 %v306, %v443
        %v445 = vpop.f32.mrb[0].mxu0
        %v446 = vpop.f32.mrb[0].mxu0
        %v447 = vadd.f32 %v306, %v446
        %v448 = vpop.f32.mrb[0].mxu0
        %449 = vmatprep.mubr.bf16.mxu0 0
        %450 = vmatmul.mubr.bf16.gmra.mrb[0].mxu0 %v374
        %v451 = vpop.f32.mrb[0].mxu0
        %v452 = vadd.f32 %v306, %v451
        %v453 = vpop.f32.mrb[0].mxu0
        %v454 = vpop.f32.mrb[0].mxu0
        %v455 = vadd.f32 %v306, %v454
        %v456 = vpop.f32.mrb[0].mxu0
        %457 = vmatprep.mubr.bf16.mxu0 0
        %458 = vmatmul.mubr.bf16.gmra.mrb[0].mxu0 %v377
        %v459 = vpop.f32.mrb[0].mxu0
        %v460 = vadd.f32 %v306, %v459
        %v461 = vpop.f32.mrb[0].mxu0
        %v462 = vpop.f32.mrb[0].mxu0
        %v463 = vadd.f32 %v306, %v462
        %v464 = vpop.f32.mrb[0].mxu0
        %465 = vmatprep.mubr.bf16.mxu0 0
        %466 = vmatmul.mubr.bf16.gmra.mrb[0].mxu0 %v380
        %v467 = vpop.f32.mrb[0].mxu0
        %v468 = vadd.f32 %v306, %v467
        %v469 = vpop.f32.mrb[0].mxu0
        %v470 = vpop.f32.mrb[0].mxu0
        %v471 = vadd.f32 %v306, %v470
        %v472 = vpop.f32.mrb[0].mxu0
        %473 = vmatprep.mubr.bf16.mxu0 0
        %474 = vmatmul.mubr.bf16.gmra.mrb[0].mxu0 %v383
        %v475 = vpop.f32.mrb[0].mxu0
        %v476 = vadd.f32 %v306, %v475
        %v477 = vpop.f32.mrb[0].mxu0
        %v478 = vpop.f32.mrb[0].mxu0
        %v479 = vadd.f32 %v306, %v478
        %v480 = vpop.f32.mrb[0].mxu0
        %481 = vdwg.mxu0
        %v482 = vmax.f32 %v420, 0.0
        %v483 = vmax.f32 %v423, 0.0
        %v484 = vmax.f32 %v428, 0.0
        %v485 = vmax.f32 %v431, 0.0
        %v486 = vmax.f32 %v436, 0.0
        %v487 = vmax.f32 %v439, 0.0
        %v488 = vmax.f32 %v444, 0.0
        %v489 = vmax.f32 %v447, 0.0
        %v490 = vmax.f32 %v452, 0.0
        %v491 = vmax.f32 %v455, 0.0
        %v492 = vmax.f32 %v460, 0.0
        %v493 = vmax.f32 %v463, 0.0
        %v494 = vmax.f32 %v468, 0.0
        %v495 = vmax.f32 %v471, 0.0
        %v496 = vmax.f32 %v476, 0.0
        %v497 = vmax.f32 %v479, 0.0
        %v498 = vpack.c.bf16 %v483, %v482
        %v499 = vpack.c.bf16 %v485, %v484
        %v500 = vpack.c.bf16 %v487, %v486
        %v501 = vpack.c.bf16 %v489, %v488
        %v502 = vpack.c.bf16 %v491, %v490
        %v503 = vpack.c.bf16 %v493, %v492
        %v504 = vpack.c.bf16 %v495, %v494
        %v505 = vpack.c.bf16 %v497, %v496
        %v506 = vld [vmem:[%s3] sm:$0xf]
        %v507 = vld [vmem:[%s3 + $0x4] sm:$0x1]
        %v508 = vld [vmem:[%s4] sm:$0x1]
        %v510 = vlaneseq
        %v511 = vshrl.u32 %v510, 7
        %v512 = vsub.s32 0, %v511
        %v513 = vrot.slane %v508, %v512
        %v517 = vunpack.c.l.b16 %v506
        %v518 = vunpack.c.l.b16 %v507
        %v519 = vpack.c.b16 %v518, %v517
        %vm520 = vcmask 80896
        %v522 = vsel %vm520, %v498, 0
        %v525 = vsel %vm520, %v499, 0
        %v528 = vsel %vm520, %v500, 0
        %v531 = vsel %vm520, %v501, 0
        %v534 = vsel %vm520, %v502, 0
        %v537 = vsel %vm520, %v503, 0
        %v540 = vsel %vm520, %v504, 0
        %v543 = vsel %vm520, %v505, 0
        %vm545 = vcmask 1044480
        %v547 = vsel %vm545, %v519, 0
        %549 = vmatprep.subr.bf16.mxu0 0
        %550 = vmatpush1.bf16.msra.mxu0 %v547
        %551 = vmatprep.subr.bf16.mxu0 0
        %552 = vmatpush1.bf16.msra.mxu0 0
        %553 = vmatprep.subr.bf16.mxu0 0
        %554 = vmatpush1.bf16.msra.mxu0 0
        %555 = vmatprep.subr.bf16.mxu0 0
        %556 = vmatpush1.bf16.msra.mxu0 0
        %557 = vmatprep.subr.bf16.mxu0 0
        %558 = vmatpush1.bf16.msra.mxu0 0
        %559 = vmatprep.subr.bf16.mxu0 0
        %560 = vmatpush1.bf16.msra.mxu0 0
        %561 = vmatprep.subr.bf16.mxu0 0
        %562 = vmatpush1.bf16.msra.mxu0 0
        %563 = vmatprep.subr.bf16.mxu0 0
        %564 = vmatpush1.bf16.msra.mxu0 0
        %565 = vmatprep.subr.bf16.mxu0 0
        %566 = vmatpush1.bf16.msra.mxu0 0
        %567 = vmatprep.subr.bf16.mxu0 0
        %568 = vmatpush1.bf16.msra.mxu0 0
        %569 = vmatprep.subr.bf16.mxu0 0
        %570 = vmatpush1.bf16.msra.mxu0 0
        %571 = vmatprep.subr.bf16.mxu0 0
        %572 = vmatpush1.bf16.msra.mxu0 0
        %573 = vmatprep.subr.bf16.mxu0 0
        %574 = vmatpush1.bf16.msra.mxu0 0
        %575 = vmatprep.subr.bf16.mxu0 0
        %576 = vmatpush1.bf16.msra.mxu0 0
        %577 = vmatprep.subr.bf16.mxu0 0
        %578 = vmatpush1.bf16.msra.mxu0 0
        %579 = vmatprep.subr.bf16.mxu0 0
        %580 = vmatpush1.bf16.msra.mxu0 0
        %581 = vmatprep.mubr.bf16.mxu0 0
        %582 = vmatmul.mubr.bf16.gmra.mrb[0].mxu0 %v522
        %v583 = vpop.f32.mrb[0].mxu0
        %v584 = vadd.f32 %v513, %v583
        %v585 = vpop.f32.mrb[0].mxu0
        %v586 = vpop.f32.mrb[0].mxu0
        %v587 = vadd.f32 %v513, %v586
        %v588 = vpop.f32.mrb[0].mxu0
        %589 = vmatprep.mubr.bf16.mxu0 0
        %590 = vmatmul.mubr.bf16.gmra.mrb[0].mxu0 %v525
        %v591 = vpop.f32.mrb[0].mxu0
        %v592 = vadd.f32 %v513, %v591
        %v593 = vpop.f32.mrb[0].mxu0
        %v594 = vpop.f32.mrb[0].mxu0
        %v595 = vadd.f32 %v513, %v594
        %v596 = vpop.f32.mrb[0].mxu0
        %597 = vmatprep.mubr.bf16.mxu0 0
        %598 = vmatmul.mubr.bf16.gmra.mrb[0].mxu0 %v528
        %v599 = vpop.f32.mrb[0].mxu0
        %v600 = vadd.f32 %v513, %v599
        %v601 = vpop.f32.mrb[0].mxu0
        %v602 = vpop.f32.mrb[0].mxu0
        %v603 = vadd.f32 %v513, %v602
        %v604 = vpop.f32.mrb[0].mxu0
        %605 = vmatprep.mubr.bf16.mxu0 0
        %606 = vmatmul.mubr.bf16.gmra.mrb[0].mxu0 %v531
        %v607 = vpop.f32.mrb[0].mxu0
        %v608 = vadd.f32 %v513, %v607
        %v609 = vpop.f32.mrb[0].mxu0
        %v610 = vpop.f32.mrb[0].mxu0
        %v611 = vadd.f32 %v513, %v610
        %v612 = vpop.f32.mrb[0].mxu0
        %613 = vmatprep.mubr.bf16.mxu0 0
        %614 = vmatmul.mubr.bf16.gmra.mrb[0].mxu0 %v534
        %v615 = vpop.f32.mrb[0].mxu0
        %v616 = vadd.f32 %v513, %v615
        %v617 = vpop.f32.mrb[0].mxu0
        %v618 = vpop.f32.mrb[0].mxu0
        %v619 = vadd.f32 %v513, %v618
        %v620 = vpop.f32.mrb[0].mxu0
        %621 = vmatprep.mubr.bf16.mxu0 0
        %622 = vmatmul.mubr.bf16.gmra.mrb[0].mxu0 %v537
        %v623 = vpop.f32.mrb[0].mxu0
        %v624 = vadd.f32 %v513, %v623
        %v625 = vpop.f32.mrb[0].mxu0
        %v626 = vpop.f32.mrb[0].mxu0
        %v627 = vadd.f32 %v513, %v626
        %v628 = vpop.f32.mrb[0].mxu0
        %629 = vmatprep.mubr.bf16.mxu0 0
        %630 = vmatmul.mubr.bf16.gmra.mrb[0].mxu0 %v540
        %v631 = vpop.f32.mrb[0].mxu0
        %v632 = vadd.f32 %v513, %v631
        %v633 = vpop.f32.mrb[0].mxu0
        %v634 = vpop.f32.mrb[0].mxu0
        %v635 = vadd.f32 %v513, %v634
        %v636 = vpop.f32.mrb[0].mxu0
        %637 = vmatprep.mubr.bf16.mxu0 0
        %638 = vmatmul.mubr.bf16.gmra.mrb[0].mxu0 %v543
        %v639 = vpop.f32.mrb[0].mxu0
        %v640 = vadd.f32 %v513, %v639
        %v641 = vpop.f32.mrb[0].mxu0
        %v642 = vpop.f32.mrb[0].mxu0
        %v643 = vadd.f32 %v513, %v642
        %v644 = vpop.f32.mrb[0].mxu0
        %645 = vdwg.mxu0
        %v646 = vmax.f32 %v584, 0.0
        %v647 = vmax.f32 %v587, 0.0
        %v648 = vmax.f32 %v592, 0.0
        %v649 = vmax.f32 %v595, 0.0
        %v650 = vmax.f32 %v600, 0.0
        %v651 = vmax.f32 %v603, 0.0
        %v652 = vmax.f32 %v608, 0.0
        %v653 = vmax.f32 %v611, 0.0
        %v654 = vmax.f32 %v616, 0.0
        %v655 = vmax.f32 %v619, 0.0
        %v656 = vmax.f32 %v624, 0.0
        %v657 = vmax.f32 %v627, 0.0
        %v658 = vmax.f32 %v632, 0.0
        %v659 = vmax.f32 %v635, 0.0
        %v660 = vmax.f32 %v640, 0.0
        %v661 = vmax.f32 %v643, 0.0
        %v662 = vpack.c.bf16 %v647, %v646
        %v663 = vpack.c.bf16 %v649, %v648
        %v664 = vpack.c.bf16 %v651, %v650
        %v665 = vpack.c.bf16 %v653, %v652
        %v666 = vpack.c.bf16 %v655, %v654
        %v667 = vpack.c.bf16 %v657, %v656
        %v668 = vpack.c.bf16 %v659, %v658
        %v669 = vpack.c.bf16 %v661, %v660
        %v670 = vld [vmem:[%s5] sm:$0x1]
        %v671 = vld [vmem:[#allocation2] sm:$0x1]
        %673 = vset.pattern.permute.xlu0 0
        %674 = vperm.xlu0 %673, %v671
        %v675 = vpop.permute.xlu0 %674
        %v677 = vlaneseq
        %v678 = vshrl.u32 %v677, 7
        %v679 = vsub.s32 0, %v678
        %v680 = vrot.slane %v675, %v679
        %v682 = vsel %vm520, %v670, 0
        %v685 = vsel %vm520, %v662, 0
        %v688 = vsel %vm520, %v663, 0
        %v691 = vsel %vm520, %v664, 0
        %v694 = vsel %vm520, %v665, 0
        %v697 = vsel %vm520, %v666, 0
        %v700 = vsel %vm520, %v667, 0
        %v703 = vsel %vm520, %v668, 0
        %v706 = vsel %vm520, %v669, 0
        %708 = vmatprep.subr.bf16.mxu0 0
        %709 = vmatpush1.bf16.xpose.msra.mxu0 %v685
        %710 = vmatprep.subr.bf16.mxu0 0
        %711 = vmatpush1.bf16.xpose.msra.mxu0 %v688
        %712 = vmatprep.subr.bf16.mxu0 0
        %713 = vmatpush1.bf16.xpose.msra.mxu0 %v691
        %714 = vmatprep.subr.bf16.mxu0 0
        %715 = vmatpush1.bf16.xpose.msra.mxu0 %v694
        %716 = vmatprep.subr.bf16.mxu0 0
        %717 = vmatpush1.bf16.xpose.msra.mxu0 %v697
        %718 = vmatprep.subr.bf16.mxu0 0
        %719 = vmatpush1.bf16.xpose.msra.mxu0 %v700
        %720 = vmatprep.subr.bf16.mxu0 0
        %721 = vmatpush1.bf16.xpose.msra.mxu0 %v703
        %722 = vmatprep.subr.bf16.mxu0 0
        %723 = vmatpush1.bf16.xpose.msra.mxu0 %v706
        %724 = vmatprep.subr.bf16.mxu0 0
        %725 = vmatpush1.bf16.xpose.msra.mxu0 0
        %726 = vmatprep.subr.bf16.mxu0 0
        %727 = vmatpush1.bf16.xpose.msra.mxu0 0
        %728 = vmatprep.subr.bf16.mxu0 0
        %729 = vmatpush1.bf16.xpose.msra.mxu0 0
        %730 = vmatprep.subr.bf16.mxu0 0
        %731 = vmatpush1.bf16.xpose.msra.mxu0 0
        %732 = vmatprep.subr.bf16.mxu0 0
        %733 = vmatpush1.bf16.xpose.msra.mxu0 0
        %734 = vmatprep.subr.bf16.mxu0 0
        %735 = vmatpush1.bf16.xpose.msra.mxu0 0
        %736 = vmatprep.subr.bf16.mxu0 0
        %737 = vmatpush1.bf16.xpose.msra.mxu0 0
        %738 = vmatprep.subr.bf16.mxu0 0
        %739 = vmatpush1.bf16.xpose.msra.mxu0 0
        %740 = vmatprep.mubr.bf16.mxu0 0
        %741 = vmatmul.mubr.bf16.gmra.mrb[0].mxu0 %v682
        %v742 = vpop.f32.mrb[0].mxu0
        %v743 = vadd.f32 %v680, %v742
        %v744 = vpop.f32.mrb[0].mxu0
        %v745 = vpop.f32.mrb[0].mxu0
        %v746 = vpop.f32.mrb[0].mxu0
        %747 = vdwg.mxu0
        %748 = vst [vmem:[%s273] sm:$0x1] %v743
        %s749 = sand.u32 %s183, 1
        %s750 = scalar_lea.sflag [#allocation4], %s749
        %s751 = sand.u32 %s183, 1
        %s752 = scalar_lea.vmem [#allocation3], %s751
        // Predicated region
        $region49: #{tpu_custom_call.1} parent=47 // pred_check
          %p753 = pneg %p193
        $region50: #{tpu_custom_call.1} parent=47 // pred_check_branch
          %755 = sbr.rel (%p753) target = $region52
        $region51: #{tpu_custom_call.1} parent=47 // pred_region
          %s757 = ssub.s32 16, 16
          %758 = vsyncadd %s750, %s757
          %s759 = smul.addr %s23, 16
          %s760 = scalar_lea.hbm %s7, %s759
          %s762 = sshll.u32 %s752, 4
          %s763 = int_to_ptr.vmem [resolvable:$true] %s762
          %765 = dma.vmem_to_hbm [thread:$0]  %s763, 16, %s760, %s750
        $region52: #{tpu_custom_call.1} parent=47 // pred_fallthru
          _
      $region48: #{tpu_custom_call.1} parent=5 // pred_fallthru
        _
      %p766 = scmp.le.s32.totalorder 2, %s18
      // Predicated region
      $region53: #{tpu_custom_call.1} parent=5 // pred_check
        %p767 = pneg %p766
      $region54: #{tpu_custom_call.1} parent=5 // pred_check_branch
        %769 = sbr.rel (%p767) target = $region56
      $region55: #{tpu_custom_call.1} parent=5 // pred_region
        %s770 = ssub.s32 %s18, 2
        // Predicated region
        $region57: #{tpu_custom_call.1} parent=55 // pred_check
          %p771 = pneg %p199
        $region58: #{tpu_custom_call.1} parent=55 // pred_check_branch
          %773 = sbr.rel (%p771) target = $region60
        $region59: #{tpu_custom_call.1} parent=55 // pred_region
          %s774 = sand.u32 %s184, 1
          %s775 = scalar_lea.sflag [#allocation4], %s774
          %s776 = sand.u32 %s184, 1
          %s777 = scalar_lea.vmem [#allocation3], %s776
          %778 = dma.done %s775, 16
        $region60: #{tpu_custom_call.1} parent=55 // pred_fallthru
          _
      $region56: #{tpu_custom_call.1} parent=5 // pred_fallthru
        _
    $region6: #{tpu_custom_call.1} parent=1 // loop_footer
      %s22 = sadd.s32 1, %s18
    $region7: #{tpu_custom_call.1} parent=1 // loop_footer_branch
      %17 = sbr.rel target = $region3
    $region8: #{tpu_custom_call.1} parent=1 // loop_exit
      _
    %779 = vsyncpa [#allocation4], 1
    %s780 = scalar_lea.sflag [#allocation4], 1
    %781 = vsyncpa %s780, 1

</llo_original>
